<compile_context>
chip_gen: v6e
topology: v6e:2x2x1
jax: 0.10.0
libtpu: 0.0.40
codegen_flags: <defaults>
</compile_context>

<pallas_src>
import numpy as np
import jax
import jax.numpy as jnp
from jax.experimental import pallas as pl
from jax.experimental.pallas import tpu as pltpu

LANE = 128  # TPU lane width; packed gradient rows are exactly one vreg row wide.


def _round_up(x, m):
    return ((x + m - 1) // m) * m


def _cdiv(a, b):
    return -(-a // b)


def _vmem_capacity_bytes():
    """Physical VMEM per TensorCore; conservative fallback if the query fails."""
    try:
        cap = int(pltpu.get_tpu_info().vmem_capacity_bytes)
        if cap > 0:
            return cap
    except Exception:
        pass
    return 64 << 20  # v7x per-TC VMEM; safe lower bound for v5e/v6e as well.


def _default_tile_rows(vmem_cap):
    # 16384 rows = 4 MiB (bf16) / 8 MiB (f32) per block on v5e/v6e (128 MiB VMEM);
    # 8192 rows on v7x (64 MiB VMEM) so 2x-buffered blocks + f32 intermediates fit.
    return 16384 if vmem_cap >= (96 << 20) else 8192


def _choose_tiling(n_rows, tile_rows, itemsize, p_pad, vmem_cap):
    """Pick (tr, r_pad, n_blocks, vmem_limit_bytes) for the packed-row kernel."""
    # >= 2 blocks whenever possible so the "parallel" grid axis feeds both v7x
    # TensorCores.  In the multi-block case tr must be a multiple of 128 (it is the
    # last dim of the (1, tr) segment-id block); in the single-block case the block
    # equals the full array, so a multiple of 8 suffices.
    nb = max(2, _cdiv(n_rows, max(tile_rows, LANE)))
    tr = _round_up(_cdiv(n_rows, nb), LANE)
    if tr >= n_rows:
        tr = _round_up(n_rows, 8)            # single block == full array dims
    r_pad = _round_up(n_rows, tr)

    headroom = 8 << 20
    while True:
        need = (2 * (tr * LANE * itemsize    # double-buffered packed block
                     + tr * 4                # double-buffered segment-id block
                     + p_pad * LANE * 4)     # double-buffered output block
                + tr * LANE * 4              # f32 g*g intermediate
                + p_pad * tr * 4             # f32 one-hot intermediate
                + (4 << 20))                 # margin for compiler scratch
        if need <= vmem_cap - headroom or tr <= LANE:
            break
        tr = max(LANE, _round_up(tr // 2, LANE))   # shrink if p_pad/dtype blows VMEM
        r_pad = _round_up(n_rows, tr)
    vmem_limit = int(min(max(need, 32 << 20), vmem_cap - headroom))
    return tr, r_pad, r_pad // tr, vmem_limit


# ---------------------------------------------------------------------------
# Pallas kernel: per-parameter sum of squares via an MXU one-hot segment reduce.
# ---------------------------------------------------------------------------
def _make_param_sumsq_kernel(p_pad):
    def kernel(seg_ref, g_ref, out_ref):
        # g_ref:   (tr, 128) packed gradient rows (any float dtype)
        # seg_ref: (1, tr)   int32 row -> parameter id
        # out_ref: (1, p_pad, 128) f32 per-block, per-parameter partial sums
        g = g_ref[...].astype(jnp.float32)
        gsq = g * g                                               # VPU
        seg = seg_ref[...]                                        # (1, tr)
        pid = jax.lax.broadcasted_iota(jnp.int32, (p_pad, seg.shape[1]), 0)
        onehot = (pid == seg).astype(jnp.float32)                 # exact 0/1, (p_pad, tr)
        # MXU segment reduce: (p_pad, tr) @ (tr, 128) -> (p_pad, 128).  The MXU is
        # otherwise idle, so this is effectively free and keeps the XLU (cross-lane
        # reduce + (1, tr) relayout of the old kernel) off the v7x critical path.
        out_ref[0] = jnp.dot(onehot, gsq,
                             preferred_element_type=jnp.float32,
                             precision=jax.lax.Precision.HIGHEST)
    return kernel


def _run_param_sumsq(packed, seg2d, p_pad, tr, nb, vmem_limit):
    r_pad = packed.shape[0]
    assert packed.shape[1] == LANE and seg2d.shape == (1, r_pad) and nb * tr == r_pad
    partials = pl.pallas_call(
        _make_param_sumsq_kernel(p_pad),
        out_shape=jax.ShapeDtypeStruct((nb, p_pad, LANE), jnp.float32),
        grid_spec=pltpu.PrefetchScalarGridSpec(
            num_scalar_prefetch=0,
            grid=(nb,),
            in_specs=[
                pl.BlockSpec((1, tr), lambda i: (0, i)),        # segment ids (int32)
                pl.BlockSpec((tr, LANE), lambda i: (i, 0)),     # packed gradient rows
            ],
            out_specs=pl.BlockSpec((1, p_pad, LANE), lambda i: (i, 0, 0)),
        ),
        compiler_params=pltpu.CompilerParams(
            dimension_semantics=("parallel",),   # independent blocks -> v7x megacore
            vmem_limit_bytes=vmem_limit,
        ),
    )(seg2d, packed)
    # Tiny finalize: (nb, p_pad, 128) -> (p_pad,) sums; one fused XLA reduce.
    return jnp.sum(partials, axis=(0, 2))


def packed_param_sumsq(packed, seg_ids, n_params, *, tile_rows=None):
    """Per-parameter sum of squared entries of a packed (R, 128) gradient buffer.

    Use this entry point directly when the trainer already keeps its gradients in
    packed (rows, 128) form with a row->param segment-id vector: that removes the
    packing copy entirely (kernel HBM reads == true gradient bytes).
    Padding entries must be zero; padding rows may map to any segment id.
    """
    packed = jnp.asarray(packed)
    r = int(packed.shape[0])
    p_pad = _round_up(max(n_params, 1), 8)
    cap = _vmem_capacity_bytes()
    tile_rows = tile_rows or _default_tile_rows(cap)
    tr, r_pad, nb, vmem_limit = _choose_tiling(r, tile_rows, packed.dtype.itemsize, p_pad, cap)
    seg2d = jnp.asarray(seg_ids, jnp.int32).reshape(1, r)
    if r_pad != r:  # only hit for externally packed buffers that are not tile-aligned
        packed = jnp.pad(packed, ((0, r_pad - r), (0, 0)))
        seg2d = jnp.pad(seg2d, ((0, 0), (0, r_pad - r)))
    return _run_param_sumsq(packed, seg2d, p_pad, tr, nb, vmem_limit)[:n_params]


# ---------------------------------------------------------------------------
# Mirrors BaseModel.log_gradients: per-parameter L2 norms + their mean & max.
# ---------------------------------------------------------------------------
def grad_norm_stats(grads, *, tile_rows=None, compute_dtype=jnp.bfloat16):
    """compute_dtype=bfloat16 (default) halves pack-write + kernel-read HBM traffic;
    it introduces ~1e-3 relative error on the norms (fine for gradient logging).
    Pass compute_dtype=jnp.float32 for near-exact norms."""
    n_params = len(grads)
    if n_params == 0:
        return None, None, None            # matches the early return in log_gradients()

    grads = [jnp.asarray(g) for g in grads]
    sizes = [int(g.size) for g in grads]
    nrows = [_cdiv(s, LANE) if s > 0 else 0 for s in sizes]
    r = sum(nrows)
    if r == 0:
        norms = jnp.zeros((n_params,), jnp.float32)
        return norms, jnp.mean(norms), jnp.max(norms)

    p_pad = _round_up(n_params, 8)
    cap = _vmem_capacity_bytes()
    dt = np.dtype(compute_dtype)
    tile_rows = tile_rows or _default_tile_rows(cap)
    tr, r_pad, nb, vmem_limit = _choose_tiling(r, tile_rows, dt.itemsize, p_pad, cap)

    # Pack with a single fused concatenate built directly at the padded (r_pad*128)
    # size -> exactly one HBM write of the packed buffer (no separate pad copy).
    # All pieces are cast to one dtype explicitly (no silent mixed-dtype upcast).
    pieces, seg = [], np.zeros((r_pad,), np.int32)
    off = 0
    for p, (g, s, nr) in enumerate(zip(grads, sizes, nrows)):
        if nr == 0:
            continue
        pieces.append(jnp.ravel(g).astype(dt))
        lane_pad = nr * LANE - s
        if lane_pad:
            pieces.append(jnp.zeros((lane_pad,), dt))
        seg[off:off + nr] = p
        off += nr
    tail = (r_pad - r) * LANE
    if tail:
        pieces.append(jnp.zeros((tail,), dt))      # zero rows contribute 0 to every sum
    packed = jnp.concatenate(pieces).reshape(r_pad, LANE)
    seg2d = jnp.asarray(seg).reshape(1, r_pad)

    per_param_sq = _run_param_sumsq(packed, seg2d, p_pad, tr, nb, vmem_limit)[:n_params]
    norms = jnp.sqrt(per_param_sq)
    # mean/max over the *real* parameters only — padded rows/params never enter.
    return norms, jnp.mean(norms), jnp.max(norms)


# ---------------------------------------------------------------------------
# Mirrors BaseModel._compute_total_loss.
# ---------------------------------------------------------------------------
def compute_total_loss(values, weights):
    """sum_i value_i * weight_i over losses with weight_i > 0.

    A dedicated pallas_call for a single-vreg multiply-reduce is pure launch
    overhead, so this stays in plain XLA where it fuses into the surrounding graph.
    Note: value*weight is evaluated for weight == 0 entries before the mask, but the
    where() selects 0.0, so non-finite values with zero weight are filtered exactly
    like filter(lambda x: x[1].weight > 0, ...).
    """
    values = jnp.asarray(values, jnp.float32)
    weights = jnp.asarray(weights, jnp.float32)
    return jnp.sum(jnp.where(weights > 0, values * weights, 0.0))


if __name__ == "__main__":
    key = jax.random.PRNGKey(0)
    k_grads, k_vals = jax.random.split(key)

    # Synthetic per-parameter gradients for a small subclass network
    # (linear layers + a small head): weight matrices + bias vectors.
    # 228 packed rows -> a 2-step, pipelined "parallel" grid even at default tiles.
    param_shapes = [(128, 144), (144,), (64, 128), (64,), (32, 64), (32,)]
    keys = jax.random.split(k_grads, len(param_shapes))
    grads = [jax.random.normal(k, s, dtype=jnp.float32) for k, s in zip(keys, param_shapes)]

    # Default path: bf16 packing (halves HBM traffic; ~1e-3 relative error on norms).
    norms_bf16, mean_bf16, max_bf16 = grad_norm_stats(grads)
    # Near-exact path: f32 packing.
    norms_f32, mean_f32, max_f32 = grad_norm_stats(grads, compute_dtype=jnp.float32)
    jax.block_until_ready((norms_bf16, mean_bf16, max_bf16, norms_f32, mean_f32, max_f32))

    # Total-loss helper: 3 losses, the last has weight 0 and must be filtered.
    raw_vals = jax.random.uniform(k_vals, (3,), dtype=jnp.float32)
    raw_weights = jnp.array([1.0, 0.5, 0.0], dtype=jnp.float32)
    total = compute_total_loss(raw_vals, raw_weights)
    jax.block_until_ready(total)

    # Correctness checks against a pure-JAX reference.
    ref_norms = jnp.stack([jnp.sqrt(jnp.sum(g.astype(jnp.float32) ** 2)) for g in grads])
    assert jnp.allclose(norms_f32, ref_norms, rtol=5e-3, atol=1e-5)
    assert jnp.allclose(mean_f32, jnp.mean(ref_norms), rtol=5e-3, atol=1e-5)
    assert jnp.allclose(max_f32, jnp.max(ref_norms), rtol=5e-3, atol=1e-5)
    assert jnp.allclose(norms_bf16, ref_norms, rtol=1e-2, atol=1e-3)
    assert jnp.allclose(mean_bf16, jnp.mean(ref_norms), rtol=1e-2, atol=1e-3)

    ref_total = jnp.sum(jnp.where(raw_weights > 0, raw_vals * raw_weights, 0.0))
    assert jnp.allclose(total, ref_total, rtol=1e-5, atol=1e-6)

    print("KERNEL_OK")
</pallas_src>

<mosaic_0001>
module attributes {stable_mosaic.version = 11 : i64} {
  func.func @kernel(%arg0: i32, %arg1: memref<1x128xi32, #tpu.memory_space<vmem>>, %arg2: memref<128x128xbf16, #tpu.memory_space<vmem>>, %arg3: memref<1x8x128xf32, #tpu.memory_space<vmem>>) attributes {dimension_semantics = [#tpu.dimension_semantics<parallel>], iteration_bounds = array<i64: 2>, scalar_prefetch = 0 : i64, scratch_operands = 0 : i64, tpu.core_type = #tpu.core_type<tc>, window_params = [{transform_indices = @transform_0, window_bounds = array<i64: 1, 128>}, {transform_indices = @transform_1, window_bounds = array<i64: 128, 128>}, {transform_indices = @transform_2, window_bounds = array<i64: 1, 8, 128>}]} {
    %c0 = arith.constant 0 : index
    %c0_0 = arith.constant 0 : index
    %0 = vector.load %arg2[%c0, %c0_0] : memref<128x128xbf16, #tpu.memory_space<vmem>>, vector<128x128xbf16>
    %1 = arith.extf %0 : vector<128x128xbf16> to vector<128x128xf32>
    %2 = arith.mulf %1, %1 : vector<128x128xf32>
    %c0_1 = arith.constant 0 : index
    %c0_2 = arith.constant 0 : index
    %3 = vector.load %arg1[%c0_1, %c0_2] : memref<1x128xi32, #tpu.memory_space<vmem>>, vector<1x128xi32>
    %4 = tpu.iota {dimensions = array<i32: 0>} : vector<8x128xi32>
    %5 = vector.broadcast %3 : vector<1x128xi32> to vector<8x128xi32>
    %6 = arith.cmpi eq, %4, %5 : vector<8x128xi32>
    %7 = arith.extui %6 : vector<8x128xi1> to vector<8x128xi32>
    %8 = arith.sitofp %7 : vector<8x128xi32> to vector<8x128xf32>
    %cst = arith.constant dense<0.000000e+00> : vector<8x128xf32>
    %9 = tpu.matmul %8, %2, %cst {dimension_numbers = #tpu.dot_dimension_numbers<[1], [0], [0], [1], [0, 0, 1, 1], [], []>, precision = #tpu.contract_precision<fp32>} : vector<8x128xf32>, vector<128x128xf32>, vector<8x128xf32> -> vector<8x128xf32>
    %c0_3 = arith.constant 0 : index
    %c0_4 = arith.constant 0 : index
    %c0_5 = arith.constant 0 : index
    %10 = vector.load %arg3[%c0_3, %c0_4, %c0_5] : memref<1x8x128xf32, #tpu.memory_space<vmem>>, vector<1x8x128xf32>
    %11 = vector.shape_cast %10 : vector<1x8x128xf32> to vector<8x128xf32>
    %12 = vector.shape_cast %9 : vector<8x128xf32> to vector<1x8x128xf32>
    tpu.vector_store %arg3[%c0_3, %c0_4, %c0_5], %12 {strides = array<i32>} : memref<1x8x128xf32, #tpu.memory_space<vmem>>, vector<1x8x128xf32>,
    return
  }
  func.func @transform_0(%arg0: i32) -> (i32, i32) {
    %c0_i32 = arith.constant 0 : i32
    %c0_i32_0 = arith.constant 0 : i32
    return %c0_i32, %arg0 : i32, i32
  }
  func.func @transform_1(%arg0: i32) -> (i32, i32) {
    %c0_i32 = arith.constant 0 : i32
    %c0_i32_0 = arith.constant 0 : i32
    return %arg0, %c0_i32 : i32, i32
  }
  func.func @transform_2(%arg0: i32) -> (i32, i32, i32) {
    %c0_i32 = arith.constant 0 : i32
    %c0_i32_0 = arith.constant 0 : i32
    %c0_i32_1 = arith.constant 0 : i32
    return %arg0, %c0_i32, %c0_i32_0 : i32, i32, i32
  }
}

</mosaic_0001>

<llo_original>
// kernel: tpu_custom_call.1
$region0: #{tpu_custom_call.1}
  #allocation0 [shape = 'u32[]', space=smem, size = 0x4, offset = 0x4, fixed_abs, tag = 'smem constant byte address 0x4 - core index']
  #allocation1 [shape = 'u32[144,128]{1,0:T(1,128)}', space=vmem, size = 0x12000, scoped, tag = 'internal scratch']
  %s0 = inlined_call_operand.hbm [shape: s32[1,256], index: 0, kind: input, shape index: {}]
  %s1 = inlined_call_operand.hbm [shape: bf16[256,128], index: 1, kind: input, shape index: {}]
  %s2 = inlined_call_operand.hbm [shape: f32[2,8,128], index: 2, kind: output, shape index: {}]
  %s3 = sld [smem:[#allocation0]]
  $region49: #{tpu_custom_call.1} parent=0
    _
  %s5 = ssub.s32 1, %s3
  %s6 = scalar_select 0, %s5, %s3
  $region1: #{tpu_custom_call.1} parent=0
    #allocation2 [shape = 'u8[1024]{0}', space=vmem, size = 0x400, scoped, tag = 'input window, operand 0']
    #allocation3 [shape = 's32[2]{0}', space=sflag, size = 0x8, scoped, tag = 'scoped memory for tpu_custom_call.1']
    #allocation4 [shape = 's32[2]{0}', space=sflag, size = 0x8, scoped, tag = 'scoped memory for tpu_custom_call.1']
    #allocation5 [shape = 'u8[65536]{0}', space=vmem, size = 0x10000, scoped, tag = 'input window, operand 1']
    #allocation6 [shape = 's32[2]{0}', space=sflag, size = 0x8, scoped, tag = 'scoped memory for tpu_custom_call.1']
    #allocation7 [shape = 'u8[8192]{0}', space=vmem, size = 0x2000, scoped, tag = 'output window, operand 0']
    %7 = vsyncpa [#allocation3], 0
    %s8 = scalar_lea.sflag [#allocation3], 1
    %9 = vsyncpa %s8, 0
    %10 = vsyncpa [#allocation6], 0
    %s11 = scalar_lea.sflag [#allocation6], 1
    %12 = vsyncpa %s11, 0
    %13 = vsyncpa [#allocation4], 0
    %s14 = scalar_lea.sflag [#allocation4], 1
    %15 = vsyncpa %s14, 0
    loop: start=0, step=1, limit=4
    $region2: #{tpu_custom_call.1} parent=1 // loop_pre_header
      _
    $region3: #{tpu_custom_call.1} parent=1 // loop_header
      %s17 = sphi 0, %s21
      %p18 = scmp.ge.s32.totalorder %s17, 4
      %s27 = sphi 0, %s29
      %s30 = sphi 0, %s27
      %s31 = sphi 0, %s30
      %s47 = sphi 0, %s31
      %s53 = sphi 0, %s55
      %s56 = sphi 0, %s53
      %s57 = sphi 0, %s56
      %s73 = sphi 0, %s57
      %s79 = sphi 0, %s81
      %s82 = sphi 0, %s79
      %s83 = sphi 0, %s82
      %s99 = sphi 0, %s83
    $region4: #{tpu_custom_call.1} parent=1 // loop_header_branch
      %20 = sbr.rel (%p18) target = $region8
    $region5: #{tpu_custom_call.1} parent=1 // loop_body
      %s22 = ssub.s32 %s17, 1
      %s23 = ssub.s32 %s17, 2
      %s24 = sadd.s32 %s17, 1
      %s25 = ssub.s32 %s17, %s24
      %p26 = scmp.eq.s32.totalorder %s25, 0
      %s28 = sadd.s32 %s27, 1
      %s29 = scalar_select %p26, %s27, %s28
      %p32 = pneg %p26
      %p33 = scmp.eq.s32.totalorder %s17, 1
      %p34 = por %p32, %p33
      %p35 = scmp.ne.s32.totalorder %s27, %s30
      %p36 = scmp.eq.s32.totalorder %s17, 0
      %p37 = por %p35, %p36
      %p38 = scmp.ne.s32.totalorder %s27, %s30
      %p39 = scmp.eq.s32.totalorder %s22, 1
      %p40 = por %p38, %p39
      %p41 = scmp.ne.s32.totalorder %s30, %s31
      %p42 = scmp.eq.s32.totalorder %s22, 0
      %p43 = por %p41, %p42
      %p44 = scmp.ne.s32.totalorder %s30, %s31
      %p45 = scmp.eq.s32.totalorder %s23, 1
      %p46 = por %p44, %p45
      %p48 = scmp.ne.s32.totalorder %s31, %s47
      %p49 = scmp.eq.s32.totalorder %s23, 0
      %p50 = por %p48, %p49
      %s51 = ssub.s32 %s17, %s24
      %p52 = scmp.eq.s32.totalorder %s51, 0
      %s54 = sadd.s32 %s53, 1
      %s55 = scalar_select %p52, %s53, %s54
      %p58 = pneg %p52
      %p59 = scmp.eq.s32.totalorder %s17, 1
      %p60 = por %p58, %p59
      %p61 = scmp.ne.s32.totalorder %s53, %s56
      %p62 = scmp.eq.s32.totalorder %s17, 0
      %p63 = por %p61, %p62
      %p64 = scmp.ne.s32.totalorder %s53, %s56
      %p65 = scmp.eq.s32.totalorder %s22, 1
      %p66 = por %p64, %p65
      %p67 = scmp.ne.s32.totalorder %s56, %s57
      %p68 = scmp.eq.s32.totalorder %s22, 0
      %p69 = por %p67, %p68
      %p70 = scmp.ne.s32.totalorder %s56, %s57
      %p71 = scmp.eq.s32.totalorder %s23, 1
      %p72 = por %p70, %p71
      %p74 = scmp.ne.s32.totalorder %s57, %s73
      %p75 = scmp.eq.s32.totalorder %s23, 0
      %p76 = por %p74, %p75
      %s77 = ssub.s32 %s17, %s24
      %p78 = scmp.eq.s32.totalorder %s77, 0
      %s80 = sadd.s32 %s79, 1
      %s81 = scalar_select %p78, %s79, %s80
      %p84 = pneg %p78
      %p85 = scmp.eq.s32.totalorder %s17, 1
      %p86 = por %p84, %p85
      %p87 = scmp.ne.s32.totalorder %s79, %s82
      %p88 = scmp.eq.s32.totalorder %s17, 0
      %p89 = por %p87, %p88
      %p90 = scmp.ne.s32.totalorder %s79, %s82
      %p91 = scmp.eq.s32.totalorder %s22, 1
      %p92 = por %p90, %p91
      %p93 = scmp.ne.s32.totalorder %s82, %s83
      %p94 = scmp.eq.s32.totalorder %s22, 0
      %p95 = por %p93, %p94
      %p96 = scmp.ne.s32.totalorder %s82, %s83
      %p97 = scmp.eq.s32.totalorder %s23, 1
      %p98 = por %p96, %p97
      %p100 = scmp.ne.s32.totalorder %s83, %s99
      %p101 = scmp.eq.s32.totalorder %s23, 0
      %p102 = por %p100, %p101
      %p103 = scmp.le.s32.totalorder 1, %s17
      %p104 = scmp.lt.s32.totalorder %s17, 3
      %p105 = pnand %p103, %p104
      %p106 = pneg %p105
      // Predicated region
      $region9: #{tpu_custom_call.1} parent=5 // pred_check
        _
      $region10: #{tpu_custom_call.1} parent=5 // pred_check_branch
        %108 = sbr.rel (%p105) target = $region12
      $region11: #{tpu_custom_call.1} parent=5 // pred_region
        %s109 = ssub.s32 %s17, 1
      $region12: #{tpu_custom_call.1} parent=5 // pred_fallthru
        _
      %p110 = scmp.lt.s32.totalorder %s17, 2
      // Predicated region
      $region13: #{tpu_custom_call.1} parent=5 // pred_check
        %p111 = pneg %p110
      $region14: #{tpu_custom_call.1} parent=5 // pred_check_branch
        %113 = sbr.rel (%p111) target = $region16
      $region15: #{tpu_custom_call.1} parent=5 // pred_region
        // Predicated region
        $region17: #{tpu_custom_call.1} parent=15 // pred_check
          %p114 = pneg %p37
        $region18: #{tpu_custom_call.1} parent=15 // pred_check_branch
          %116 = sbr.rel (%p114) target = $region20
        $region19: #{tpu_custom_call.1} parent=15 // pred_region
          %s117 = sand.u32 %s27, 1
          %s118 = scalar_lea.sflag [#allocation3], %s117
          %s119 = sand.u32 %s27, 1
          %s120 = scalar_lea.vmem [#allocation2], %s119
          %s122 = ssub.s32 16, 16
          %123 = vsyncadd %s118, %s122
          %s124 = smul.addr %s17, 16
          %s125 = scalar_lea.hbm %s0, %s124
          %s127 = sshll.u32 %s120, 4
          %s128 = int_to_ptr.vmem [resolvable:$true] %s127
          %130 = dma.hbm_to_vmem [thread:$0]  %s125, 16, %s128, %s118
        $region20: #{tpu_custom_call.1} parent=15 // pred_fallthru
          _
        // Predicated region
        $region21: #{tpu_custom_call.1} parent=15 // pred_check
          %p131 = pneg %p63
        $region22: #{tpu_custom_call.1} parent=15 // pred_check_branch
          %133 = sbr.rel (%p131) target = $region24
        $region23: #{tpu_custom_call.1} parent=15 // pred_region
          %s134 = sand.u32 %s53, 1
          %s135 = scalar_lea.sflag [#allocation6], %s134
          %s136 = sand.u32 %s53, 1
          %s137 = smul.addr %s136, 64
          %s138 = scalar_lea.vmem [#allocation5], %s137
          %s139 = smul.u32 16, %s17
          %s141 = ssub.s32 1024, 1024
          %142 = vsyncadd %s135, %s141
          %s143 = smul.addr %s139, 64
          %s144 = scalar_lea.hbm %s1, %s143
          %s145 = sshll.u32 %s138, 4
          %s146 = int_to_ptr.vmem [resolvable:$true] %s145
          %151 = dma.hbm_to_vmem [thread:$0]  %s144, 1024, %s146, %s135, 64, 64, 4
        $region24: #{tpu_custom_call.1} parent=15 // pred_fallthru
          _
      $region16: #{tpu_custom_call.1} parent=5 // pred_fallthru
        _
      %p152 = scmp.le.s32.totalorder 1, %s17
      %p153 = scmp.lt.s32.totalorder %s17, 3
      %p154 = pnand %p152, %p153
      %p155 = pneg %p154
      // Predicated region
      $region25: #{tpu_custom_call.1} parent=5 // pred_check
        _
      $region26: #{tpu_custom_call.1} parent=5 // pred_check_branch
        %157 = sbr.rel (%p154) target = $region28
      $region27: #{tpu_custom_call.1} parent=5 // pred_region
        %s158 = ssub.s32 %s17, 1
        %s159 = sand.u32 %s30, 1
        %s160 = scalar_lea.sflag [#allocation3], %s159
        %s161 = sand.u32 %s30, 1
        %s162 = scalar_lea.vmem [#allocation2], %s161
        // Predicated region
        $region29: #{tpu_custom_call.1} parent=27 // pred_check
          %p163 = pneg %p43
        $region30: #{tpu_custom_call.1} parent=27 // pred_check_branch
          %165 = sbr.rel (%p163) target = $region32
        $region31: #{tpu_custom_call.1} parent=27 // pred_region
          %166 = dma.done %s160, 16
        $region32: #{tpu_custom_call.1} parent=27 // pred_fallthru
          _
        %s167 = sand.u32 %s56, 1
        %s168 = scalar_lea.sflag [#allocation6], %s167
        %s169 = sand.u32 %s56, 1
        %s170 = smul.addr %s169, 64
        %s171 = scalar_lea.vmem [#allocation5], %s170
        // Predicated region
        $region33: #{tpu_custom_call.1} parent=27 // pred_check
          %p172 = pneg %p69
        $region34: #{tpu_custom_call.1} parent=27 // pred_check_branch
          %174 = sbr.rel (%p172) target = $region36
        $region35: #{tpu_custom_call.1} parent=27 // pred_region
          %175 = dma.done %s168, 1024
        $region36: #{tpu_custom_call.1} parent=27 // pred_fallthru
          _
        %s176 = sand.u32 %s30, 1
        %s177 = scalar_lea.sflag [#allocation3], %s176
        %s178 = sand.u32 %s30, 1
        %s179 = scalar_lea.vmem [#allocation2], %s178
        %p180 = pneg %p43
        %p181 = pneg %p40
        %s182 = sand.u32 %s56, 1
        %s183 = scalar_lea.sflag [#allocation6], %s182
        %s184 = sand.u32 %s56, 1
        %s185 = smul.addr %s184, 64
        %s186 = scalar_lea.vmem [#allocation5], %s185
        %p187 = pneg %p69
        %p188 = pneg %p66
        %p189 = pneg %p95
        %p190 = pneg %p92
        %s191 = sand.u32 %s82, 1
        %s192 = scalar_lea.sflag [#allocation4], %s191
        %s193 = sand.u32 %s82, 1
        %s194 = smul.addr %s193, 8
        %s195 = scalar_lea.vmem [#allocation7], %s194
        %s196 = smul.u32 16, %s22
        %v197 = vld [vmem:[%s171] sm:$0xf]
        %v198 = vld [vmem:[%s171 + $0x4] sm:$0xf]
        %v199 = vld [vmem:[%s171 + $0x8] sm:$0xf]
        %v200 = vld [vmem:[%s171 + $0xc] sm:$0xf]
        %v201 = vld [vmem:[%s171 + $0x10] sm:$0xf]
        %v202 = vld [vmem:[%s171 + $0x14] sm:$0xf]
        %v203 = vld [vmem:[%s171 + $0x18] sm:$0xf]
        %v204 = vld [vmem:[%s171 + $0x1c] sm:$0xf]
        %v205 = vld [vmem:[%s171 + $0x20] sm:$0xf]
        %v206 = vld [vmem:[%s171 + $0x24] sm:$0xf]
        %v207 = vld [vmem:[%s171 + $0x28] sm:$0xf]
        %v208 = vld [vmem:[%s171 + $0x2c] sm:$0xf]
        %v209 = vld [vmem:[%s171 + $0x30] sm:$0xf]
        %v210 = vld [vmem:[%s171 + $0x34] sm:$0xf]
        %v211 = vld [vmem:[%s171 + $0x38] sm:$0xf]
        %v212 = vld [vmem:[%s171 + $0x3c] sm:$0xf]
        %v213 = vunpack.c.l.bf16 %v197
        %v214 = vunpack.c.l.bf16 %v198
        %v215 = vunpack.c.l.bf16 %v199
        %v216 = vunpack.c.l.bf16 %v200
        %v217 = vunpack.c.l.bf16 %v201
        %v218 = vunpack.c.l.bf16 %v202
        %v219 = vunpack.c.l.bf16 %v203
        %v220 = vunpack.c.l.bf16 %v204
        %v221 = vunpack.c.l.bf16 %v205
        %v222 = vunpack.c.l.bf16 %v206
        %v223 = vunpack.c.l.bf16 %v207
        %v224 = vunpack.c.l.bf16 %v208
        %v225 = vunpack.c.l.bf16 %v209
        %v226 = vunpack.c.l.bf16 %v210
        %v227 = vunpack.c.l.bf16 %v211
        %v228 = vunpack.c.l.bf16 %v212
        %v229 = vmul.f32 %v213, %v213
        %v230 = vmul.f32 %v214, %v214
        %v231 = vmul.f32 %v215, %v215
        %v232 = vmul.f32 %v216, %v216
        %v233 = vmul.f32 %v217, %v217
        %v234 = vmul.f32 %v218, %v218
        %v235 = vmul.f32 %v219, %v219
        %v236 = vmul.f32 %v220, %v220
        %v237 = vmul.f32 %v221, %v221
        %v238 = vmul.f32 %v222, %v222
        %v239 = vmul.f32 %v223, %v223
        %v240 = vmul.f32 %v224, %v224
        %v241 = vmul.f32 %v225, %v225
        %v242 = vmul.f32 %v226, %v226
        %v243 = vmul.f32 %v227, %v227
        %v244 = vmul.f32 %v228, %v228
        %v245 = vld [vmem:[%s162] sm:$0x1]
        %v246 = vlaneseq
        %v247 = vshrl.u32 %v246, 7
        %v248 = vlaneseq
        %v249 = vshrl.u32 %v248, 7
        %v250 = vsub.s32 0, %v249
        %v251 = vrot.slane %v245, %v250
        %vm252 = vcmp.eq.s32.totalorder %v247, %v251
        %v253 = vsel %vm252, 1, 0
        %v254 = vcvt.s32.f32 %v253
        %255 = vmatprep.subr.mxu0 0.0
        %v256 = vand.u32 %v244, 4294901760
        %257 = vmatpush1.msra.mxu0 %v256
        %258 = vmatprep.subr.mxu0 0.0
        %v259 = vand.u32 %v243, 4294901760
        %260 = vmatpush1.msra.mxu0 %v259
        %261 = vmatprep.subr.mxu0 0.0
        %v262 = vand.u32 %v242, 4294901760
        %263 = vmatpush1.msra.mxu0 %v262
        %264 = vmatprep.subr.mxu0 0.0
        %v265 = vand.u32 %v241, 4294901760
        %266 = vmatpush1.msra.mxu0 %v265
        %267 = vmatprep.subr.mxu0 0.0
        %v268 = vand.u32 %v240, 4294901760
        %269 = vmatpush1.msra.mxu0 %v268
        %270 = vmatprep.subr.mxu0 0.0
        %v271 = vand.u32 %v239, 4294901760
        %272 = vmatpush1.msra.mxu0 %v271
        %273 = vmatprep.subr.mxu0 0.0
        %v274 = vand.u32 %v238, 4294901760
        %275 = vmatpush1.msra.mxu0 %v274
        %276 = vmatprep.subr.mxu0 0.0
        %v277 = vand.u32 %v237, 4294901760
        %278 = vmatpush1.msra.mxu0 %v277
        %279 = vmatprep.subr.mxu0 0.0
        %v280 = vand.u32 %v236, 4294901760
        %281 = vmatpush1.msra.mxu0 %v280
        %282 = vmatprep.subr.mxu0 0.0
        %v283 = vand.u32 %v235, 4294901760
        %284 = vmatpush1.msra.mxu0 %v283
        %285 = vmatprep.subr.mxu0 0.0
        %v286 = vand.u32 %v234, 4294901760
        %287 = vmatpush1.msra.mxu0 %v286
        %288 = vmatprep.subr.mxu0 0.0
        %v289 = vand.u32 %v233, 4294901760
        %290 = vmatpush1.msra.mxu0 %v289
        %291 = vmatprep.subr.mxu0 0.0
        %v292 = vand.u32 %v232, 4294901760
        %293 = vmatpush1.msra.mxu0 %v292
        %294 = vmatprep.subr.mxu0 0.0
        %v295 = vand.u32 %v231, 4294901760
        %296 = vmatpush1.msra.mxu0 %v295
        %297 = vmatprep.subr.mxu0 0.0
        %v298 = vand.u32 %v230, 4294901760
        %299 = vmatpush1.msra.mxu0 %v298
        %300 = vmatprep.subr.mxu0 0.0
        %v301 = vand.u32 %v229, 4294901760
        %302 = vmatpush1.msra.mxu0 %v301
        %303 = vmatprep.subr.mxu0 0.0
        %304 = vmatpush2.msra.mxu0 0.0
        %305 = vmatprep.subr.mxu0 0.0
        %306 = vmatpush2.msra.mxu0 0.0
        %307 = vmatprep.subr.mxu0 0.0
        %308 = vmatpush2.msra.mxu0 0.0
        %309 = vmatprep.subr.mxu0 0.0
        %310 = vmatpush2.msra.mxu0 0.0
        %311 = vmatprep.subr.mxu0 0.0
        %312 = vmatpush2.msra.mxu0 0.0
        %313 = vmatprep.subr.mxu0 0.0
        %314 = vmatpush2.msra.mxu0 0.0
        %315 = vmatprep.subr.mxu0 0.0
        %316 = vmatpush2.msra.mxu0 0.0
        %317 = vmatprep.subr.mxu0 0.0
        %318 = vmatpush2.msra.mxu0 0.0
        %319 = vmatprep.subr.mxu0 0.0
        %320 = vmatpush2.msra.mxu0 0.0
        %321 = vmatprep.subr.mxu0 0.0
        %322 = vmatpush2.msra.mxu0 0.0
        %323 = vmatprep.subr.mxu0 0.0
        %324 = vmatpush2.msra.mxu0 0.0
        %325 = vmatprep.subr.mxu0 0.0
        %326 = vmatpush2.msra.mxu0 0.0
        %327 = vmatprep.subr.mxu0 0.0
        %328 = vmatpush2.msra.mxu0 0.0
        %329 = vmatprep.subr.mxu0 0.0
        %330 = vmatpush2.msra.mxu0 0.0
        %331 = vmatprep.subr.mxu0 0.0
        %332 = vmatpush2.msra.mxu0 0.0
        %333 = vmatprep.subr.mxu0 0.0
        %334 = vmatpush2.msra.mxu0 0.0
        %335 = vmatprep.mubr.f32.mxu0 0.0
        %v336 = vand.u32 %v254, 4294901760
        %v337 = vsub.f32 %v254, %v336
        %v338 = vand.u32 %v337, 4294901760
        %v339 = vsub.f32 %v337, %v338
        %v340 = vand.u32 %v339, 4294901760
        %341 = vmatmul.mubr.f32.gmra.mxu0 %v340
        %v342 = vpop.f32.mrf.mxu0
        %v343 = vadd.f32 0.0, %v342
        %v344 = vpop.f32.mrf.mxu0
        %345 = vdwg.mxu0
        %346 = vmatprep.subr.mxu0 0.0
        %v347 = vand.u32 %v244, 4294901760
        %v348 = vsub.f32 %v244, %v347
        %v349 = vand.u32 %v348, 4294901760
        %v350 = vsub.f32 %v348, %v349
        %v351 = vand.u32 %v350, 4294901760
        %352 = vmatpush1.msra.mxu0 %v351
        %353 = vmatprep.subr.mxu0 0.0
        %v354 = vand.u32 %v243, 4294901760
        %v355 = vsub.f32 %v243, %v354
        %v356 = vand.u32 %v355, 4294901760
        %v357 = vsub.f32 %v355, %v356
        %v358 = vand.u32 %v357, 4294901760
        %359 = vmatpush1.msra.mxu0 %v358
        %360 = vmatprep.subr.mxu0 0.0
        %v361 = vand.u32 %v242, 4294901760
        %v362 = vsub.f32 %v242, %v361
        %v363 = vand.u32 %v362, 4294901760
        %v364 = vsub.f32 %v362, %v363
        %v365 = vand.u32 %v364, 4294901760
        %366 = vmatpush1.msra.mxu0 %v365
        %367 = vmatprep.subr.mxu0 0.0
        %v368 = vand.u32 %v241, 4294901760
        %v369 = vsub.f32 %v241, %v368
        %v370 = vand.u32 %v369, 4294901760
        %v371 = vsub.f32 %v369, %v370
        %v372 = vand.u32 %v371, 4294901760
        %373 = vmatpush1.msra.mxu0 %v372
        %374 = vmatprep.subr.mxu0 0.0
        %v375 = vand.u32 %v240, 4294901760
        %v376 = vsub.f32 %v240, %v375
        %v377 = vand.u32 %v376, 4294901760
        %v378 = vsub.f32 %v376, %v377
        %v379 = vand.u32 %v378, 4294901760
        %380 = vmatpush1.msra.mxu0 %v379
        %381 = vmatprep.subr.mxu0 0.0
        %v382 = vand.u32 %v239, 4294901760
        %v383 = vsub.f32 %v239, %v382
        %v384 = vand.u32 %v383, 4294901760
        %v385 = vsub.f32 %v383, %v384
        %v386 = vand.u32 %v385, 4294901760
        %387 = vmatpush1.msra.mxu0 %v386
        %388 = vmatprep.subr.mxu0 0.0
        %v389 = vand.u32 %v238, 4294901760
        %v390 = vsub.f32 %v238, %v389
        %v391 = vand.u32 %v390, 4294901760
        %v392 = vsub.f32 %v390, %v391
        %v393 = vand.u32 %v392, 4294901760
        %394 = vmatpush1.msra.mxu0 %v393
        %395 = vmatprep.subr.mxu0 0.0
        %v396 = vand.u32 %v237, 4294901760
        %v397 = vsub.f32 %v237, %v396
        %v398 = vand.u32 %v397, 4294901760
        %v399 = vsub.f32 %v397, %v398
        %v400 = vand.u32 %v399, 4294901760
        %401 = vmatpush1.msra.mxu0 %v400
        %402 = vmatprep.subr.mxu0 0.0
        %v403 = vand.u32 %v236, 4294901760
        %v404 = vsub.f32 %v236, %v403
        %v405 = vand.u32 %v404, 4294901760
        %v406 = vsub.f32 %v404, %v405
        %v407 = vand.u32 %v406, 4294901760
        %408 = vmatpush1.msra.mxu0 %v407
        %409 = vmatprep.subr.mxu0 0.0
        %v410 = vand.u32 %v235, 4294901760
        %v411 = vsub.f32 %v235, %v410
        %v412 = vand.u32 %v411, 4294901760
        %v413 = vsub.f32 %v411, %v412
        %v414 = vand.u32 %v413, 4294901760
        %415 = vmatpush1.msra.mxu0 %v414
        %416 = vmatprep.subr.mxu0 0.0
        %v417 = vand.u32 %v234, 4294901760
        %v418 = vsub.f32 %v234, %v417
        %v419 = vand.u32 %v418, 4294901760
        %v420 = vsub.f32 %v418, %v419
        %v421 = vand.u32 %v420, 4294901760
        %422 = vmatpush1.msra.mxu0 %v421
        %423 = vmatprep.subr.mxu0 0.0
        %v424 = vand.u32 %v233, 4294901760
        %v425 = vsub.f32 %v233, %v424
        %v426 = vand.u32 %v425, 4294901760
        %v427 = vsub.f32 %v425, %v426
        %v428 = vand.u32 %v427, 4294901760
        %429 = vmatpush1.msra.mxu0 %v428
        %430 = vmatprep.subr.mxu0 0.0
        %v431 = vand.u32 %v232, 4294901760
        %v432 = vsub.f32 %v232, %v431
        %v433 = vand.u32 %v432, 4294901760
        %v434 = vsub.f32 %v432, %v433
        %v435 = vand.u32 %v434, 4294901760
        %436 = vmatpush1.msra.mxu0 %v435
        %437 = vmatprep.subr.mxu0 0.0
        %v438 = vand.u32 %v231, 4294901760
        %v439 = vsub.f32 %v231, %v438
        %v440 = vand.u32 %v439, 4294901760
        %v441 = vsub.f32 %v439, %v440
        %v442 = vand.u32 %v441, 4294901760
        %443 = vmatpush1.msra.mxu0 %v442
        %444 = vmatprep.subr.mxu0 0.0
        %v445 = vand.u32 %v230, 4294901760
        %v446 = vsub.f32 %v230, %v445
        %v447 = vand.u32 %v446, 4294901760
        %v448 = vsub.f32 %v446, %v447
        %v449 = vand.u32 %v448, 4294901760
        %450 = vmatpush1.msra.mxu0 %v449
        %451 = vmatprep.subr.mxu0 0.0
        %v452 = vand.u32 %v229, 4294901760
        %v453 = vsub.f32 %v229, %v452
        %v454 = vand.u32 %v453, 4294901760
        %v455 = vsub.f32 %v453, %v454
        %v456 = vand.u32 %v455, 4294901760
        %457 = vmatpush1.msra.mxu0 %v456
        %458 = vmatprep.subr.mxu0 0.0
        %459 = vmatpush2.msra.mxu0 0.0
        %460 = vmatprep.subr.mxu0 0.0
        %461 = vmatpush2.msra.mxu0 0.0
        %462 = vmatprep.subr.mxu0 0.0
        %463 = vmatpush2.msra.mxu0 0.0
        %464 = vmatprep.subr.mxu0 0.0
        %465 = vmatpush2.msra.mxu0 0.0
        %466 = vmatprep.subr.mxu0 0.0
        %467 = vmatpush2.msra.mxu0 0.0
        %468 = vmatprep.subr.mxu0 0.0
        %469 = vmatpush2.msra.mxu0 0.0
        %470 = vmatprep.subr.mxu0 0.0
        %471 = vmatpush2.msra.mxu0 0.0
        %472 = vmatprep.subr.mxu0 0.0
        %473 = vmatpush2.msra.mxu0 0.0
        %474 = vmatprep.subr.mxu0 0.0
        %475 = vmatpush2.msra.mxu0 0.0
        %476 = vmatprep.subr.mxu0 0.0
        %477 = vmatpush2.msra.mxu0 0.0
        %478 = vmatprep.subr.mxu0 0.0
        %479 = vmatpush2.msra.mxu0 0.0
        %480 = vmatprep.subr.mxu0 0.0
        %481 = vmatpush2.msra.mxu0 0.0
        %482 = vmatprep.subr.mxu0 0.0
        %483 = vmatpush2.msra.mxu0 0.0
        %484 = vmatprep.subr.mxu0 0.0
        %485 = vmatpush2.msra.mxu0 0.0
        %486 = vmatprep.subr.mxu0 0.0
        %487 = vmatpush2.msra.mxu0 0.0
        %488 = vmatprep.subr.mxu0 0.0
        %489 = vmatpush2.msra.mxu0 0.0
        %490 = vmatprep.mubr.f32.mxu0 0.0
        %v491 = vand.u32 %v254, 4294901760
        %492 = vmatmul.mubr.f32.gmra.mxu0 %v491
        %v493 = vpop.f32.mrf.mxu0
        %v494 = vadd.f32 %v343, %v493
        %v495 = vpop.f32.mrf.mxu0
        %496 = vdwg.mxu0
        %497 = vmatprep.subr.mxu0 0.0
        %v498 = vand.u32 %v244, 4294901760
        %v499 = vsub.f32 %v244, %v498
        %500 = vmatpush1.msra.mxu0 %v499
        %501 = vmatprep.subr.mxu0 0.0
        %v502 = vand.u32 %v243, 4294901760
        %v503 = vsub.f32 %v243, %v502
        %504 = vmatpush1.msra.mxu0 %v503
        %505 = vmatprep.subr.mxu0 0.0
        %v506 = vand.u32 %v242, 4294901760
        %v507 = vsub.f32 %v242, %v506
        %508 = vmatpush1.msra.mxu0 %v507
        %509 = vmatprep.subr.mxu0 0.0
        %v510 = vand.u32 %v241, 4294901760
        %v511 = vsub.f32 %v241, %v510
        %512 = vmatpush1.msra.mxu0 %v511
        %513 = vmatprep.subr.mxu0 0.0
        %v514 = vand.u32 %v240, 4294901760
        %v515 = vsub.f32 %v240, %v514
        %516 = vmatpush1.msra.mxu0 %v515
        %517 = vmatprep.subr.mxu0 0.0
        %v518 = vand.u32 %v239, 4294901760
        %v519 = vsub.f32 %v239, %v518
        %520 = vmatpush1.msra.mxu0 %v519
        %521 = vmatprep.subr.mxu0 0.0
        %v522 = vand.u32 %v238, 4294901760
        %v523 = vsub.f32 %v238, %v522
        %524 = vmatpush1.msra.mxu0 %v523
        %525 = vmatprep.subr.mxu0 0.0
        %v526 = vand.u32 %v237, 4294901760
        %v527 = vsub.f32 %v237, %v526
        %528 = vmatpush1.msra.mxu0 %v527
        %529 = vmatprep.subr.mxu0 0.0
        %v530 = vand.u32 %v236, 4294901760
        %v531 = vsub.f32 %v236, %v530
        %532 = vmatpush1.msra.mxu0 %v531
        %533 = vmatprep.subr.mxu0 0.0
        %v534 = vand.u32 %v235, 4294901760
        %v535 = vsub.f32 %v235, %v534
        %536 = vmatpush1.msra.mxu0 %v535
        %537 = vmatprep.subr.mxu0 0.0
        %v538 = vand.u32 %v234, 4294901760
        %v539 = vsub.f32 %v234, %v538
        %540 = vmatpush1.msra.mxu0 %v539
        %541 = vmatprep.subr.mxu0 0.0
        %v542 = vand.u32 %v233, 4294901760
        %v543 = vsub.f32 %v233, %v542
        %544 = vmatpush1.msra.mxu0 %v543
        %545 = vmatprep.subr.mxu0 0.0
        %v546 = vand.u32 %v232, 4294901760
        %v547 = vsub.f32 %v232, %v546
        %548 = vmatpush1.msra.mxu0 %v547
        %549 = vmatprep.subr.mxu0 0.0
        %v550 = vand.u32 %v231, 4294901760
        %v551 = vsub.f32 %v231, %v550
        %552 = vmatpush1.msra.mxu0 %v551
        %553 = vmatprep.subr.mxu0 0.0
        %v554 = vand.u32 %v230, 4294901760
        %v555 = vsub.f32 %v230, %v554
        %556 = vmatpush1.msra.mxu0 %v555
        %557 = vmatprep.subr.mxu0 0.0
        %v558 = vand.u32 %v229, 4294901760
        %v559 = vsub.f32 %v229, %v558
        %560 = vmatpush1.msra.mxu0 %v559
        %561 = vmatprep.subr.mxu0 0.0
        %562 = vmatpush2.msra.mxu0 0.0
        %563 = vmatprep.subr.mxu0 0.0
        %564 = vmatpush2.msra.mxu0 0.0
        %565 = vmatprep.subr.mxu0 0.0
        %566 = vmatpush2.msra.mxu0 0.0
        %567 = vmatprep.subr.mxu0 0.0
        %568 = vmatpush2.msra.mxu0 0.0
        %569 = vmatprep.subr.mxu0 0.0
        %570 = vmatpush2.msra.mxu0 0.0
        %571 = vmatprep.subr.mxu0 0.0
        %572 = vmatpush2.msra.mxu0 0.0
        %573 = vmatprep.subr.mxu0 0.0
        %574 = vmatpush2.msra.mxu0 0.0
        %575 = vmatprep.subr.mxu0 0.0
        %576 = vmatpush2.msra.mxu0 0.0
        %577 = vmatprep.subr.mxu0 0.0
        %578 = vmatpush2.msra.mxu0 0.0
        %579 = vmatprep.subr.mxu0 0.0
        %580 = vmatpush2.msra.mxu0 0.0
        %581 = vmatprep.subr.mxu0 0.0
        %582 = vmatpush2.msra.mxu0 0.0
        %583 = vmatprep.subr.mxu0 0.0
        %584 = vmatpush2.msra.mxu0 0.0
        %585 = vmatprep.subr.mxu0 0.0
        %586 = vmatpush2.msra.mxu0 0.0
        %587 = vmatprep.subr.mxu0 0.0
        %588 = vmatpush2.msra.mxu0 0.0
        %589 = vmatprep.subr.mxu0 0.0
        %590 = vmatpush2.msra.mxu0 0.0
        %591 = vmatprep.subr.mxu0 0.0
        %592 = vmatpush2.msra.mxu0 0.0
        %593 = vmatprep.mubr.f32.mxu0 0.0
        %v594 = vand.u32 %v254, 4294901760
        %v595 = vsub.f32 %v254, %v594
        %596 = vmatmul.mubr.f32.gmra.mxu0 %v595
        %v597 = vpop.f32.mrf.mxu0
        %v598 = vadd.f32 %v494, %v597
        %v599 = vpop.f32.mrf.mxu0
        %600 = vdwg.mxu0
        %601 = vmatprep.subr.mxu0 0.0
        %v602 = vand.u32 %v244, 4294901760
        %603 = vmatpush1.msra.mxu0 %v602
        %604 = vmatprep.subr.mxu0 0.0
        %v605 = vand.u32 %v243, 4294901760
        %606 = vmatpush1.msra.mxu0 %v605
        %607 = vmatprep.subr.mxu0 0.0
        %v608 = vand.u32 %v242, 4294901760
        %609 = vmatpush1.msra.mxu0 %v608
        %610 = vmatprep.subr.mxu0 0.0
        %v611 = vand.u32 %v241, 4294901760
        %612 = vmatpush1.msra.mxu0 %v611
        %613 = vmatprep.subr.mxu0 0.0
        %v614 = vand.u32 %v240, 4294901760
        %615 = vmatpush1.msra.mxu0 %v614
        %616 = vmatprep.subr.mxu0 0.0
        %v617 = vand.u32 %v239, 4294901760
        %618 = vmatpush1.msra.mxu0 %v617
        %619 = vmatprep.subr.mxu0 0.0
        %v620 = vand.u32 %v238, 4294901760
        %621 = vmatpush1.msra.mxu0 %v620
        %622 = vmatprep.subr.mxu0 0.0
        %v623 = vand.u32 %v237, 4294901760
        %624 = vmatpush1.msra.mxu0 %v623
        %625 = vmatprep.subr.mxu0 0.0
        %v626 = vand.u32 %v236, 4294901760
        %627 = vmatpush1.msra.mxu0 %v626
        %628 = vmatprep.subr.mxu0 0.0
        %v629 = vand.u32 %v235, 4294901760
        %630 = vmatpush1.msra.mxu0 %v629
        %631 = vmatprep.subr.mxu0 0.0
        %v632 = vand.u32 %v234, 4294901760
        %633 = vmatpush1.msra.mxu0 %v632
        %634 = vmatprep.subr.mxu0 0.0
        %v635 = vand.u32 %v233, 4294901760
        %636 = vmatpush1.msra.mxu0 %v635
        %637 = vmatprep.subr.mxu0 0.0
        %v638 = vand.u32 %v232, 4294901760
        %639 = vmatpush1.msra.mxu0 %v638
        %640 = vmatprep.subr.mxu0 0.0
        %v641 = vand.u32 %v231, 4294901760
        %642 = vmatpush1.msra.mxu0 %v641
        %643 = vmatprep.subr.mxu0 0.0
        %v644 = vand.u32 %v230, 4294901760
        %645 = vmatpush1.msra.mxu0 %v644
        %646 = vmatprep.subr.mxu0 0.0
        %v647 = vand.u32 %v229, 4294901760
        %648 = vmatpush1.msra.mxu0 %v647
        %649 = vmatprep.subr.mxu0 0.0
        %650 = vmatpush2.msra.mxu0 0.0
        %651 = vmatprep.subr.mxu0 0.0
        %652 = vmatpush2.msra.mxu0 0.0
        %653 = vmatprep.subr.mxu0 0.0
        %654 = vmatpush2.msra.mxu0 0.0
        %655 = vmatprep.subr.mxu0 0.0
        %656 = vmatpush2.msra.mxu0 0.0
        %657 = vmatprep.subr.mxu0 0.0
        %658 = vmatpush2.msra.mxu0 0.0
        %659 = vmatprep.subr.mxu0 0.0
        %660 = vmatpush2.msra.mxu0 0.0
        %661 = vmatprep.subr.mxu0 0.0
        %662 = vmatpush2.msra.mxu0 0.0
        %663 = vmatprep.subr.mxu0 0.0
        %664 = vmatpush2.msra.mxu0 0.0
        %665 = vmatprep.subr.mxu0 0.0
        %666 = vmatpush2.msra.mxu0 0.0
        %667 = vmatprep.subr.mxu0 0.0
        %668 = vmatpush2.msra.mxu0 0.0
        %669 = vmatprep.subr.mxu0 0.0
        %670 = vmatpush2.msra.mxu0 0.0
        %671 = vmatprep.subr.mxu0 0.0
        %672 = vmatpush2.msra.mxu0 0.0
        %673 = vmatprep.subr.mxu0 0.0
        %674 = vmatpush2.msra.mxu0 0.0
        %675 = vmatprep.subr.mxu0 0.0
        %676 = vmatpush2.msra.mxu0 0.0
        %677 = vmatprep.subr.mxu0 0.0
        %678 = vmatpush2.msra.mxu0 0.0
        %679 = vmatprep.subr.mxu0 0.0
        %680 = vmatpush2.msra.mxu0 0.0
        %681 = vmatprep.mubr.f32.mxu0 0.0
        %v682 = vand.u32 %v254, 4294901760
        %v683 = vsub.f32 %v254, %v682
        %v684 = vand.u32 %v683, 4294901760
        %685 = vmatmul.mubr.f32.gmra.mxu0 %v684
        %v686 = vpop.f32.mrf.mxu0
        %v687 = vadd.f32 %v598, %v686
        %v688 = vpop.f32.mrf.mxu0
        %689 = vdwg.mxu0
        %690 = vmatprep.subr.mxu0 0.0
        %v691 = vand.u32 %v244, 4294901760
        %v692 = vsub.f32 %v244, %v691
        %v693 = vand.u32 %v692, 4294901760
        %694 = vmatpush1.msra.mxu0 %v693
        %695 = vmatprep.subr.mxu0 0.0
        %v696 = vand.u32 %v243, 4294901760
        %v697 = vsub.f32 %v243, %v696
        %v698 = vand.u32 %v697, 4294901760
        %699 = vmatpush1.msra.mxu0 %v698
        %700 = vmatprep.subr.mxu0 0.0
        %v701 = vand.u32 %v242, 4294901760
        %v702 = vsub.f32 %v242, %v701
        %v703 = vand.u32 %v702, 4294901760
        %704 = vmatpush1.msra.mxu0 %v703
        %705 = vmatprep.subr.mxu0 0.0
        %v706 = vand.u32 %v241, 4294901760
        %v707 = vsub.f32 %v241, %v706
        %v708 = vand.u32 %v707, 4294901760
        %709 = vmatpush1.msra.mxu0 %v708
        %710 = vmatprep.subr.mxu0 0.0
        %v711 = vand.u32 %v240, 4294901760
        %v712 = vsub.f32 %v240, %v711
        %v713 = vand.u32 %v712, 4294901760
        %714 = vmatpush1.msra.mxu0 %v713
        %715 = vmatprep.subr.mxu0 0.0
        %v716 = vand.u32 %v239, 4294901760
        %v717 = vsub.f32 %v239, %v716
        %v718 = vand.u32 %v717, 4294901760
        %719 = vmatpush1.msra.mxu0 %v718
        %720 = vmatprep.subr.mxu0 0.0
        %v721 = vand.u32 %v238, 4294901760
        %v722 = vsub.f32 %v238, %v721
        %v723 = vand.u32 %v722, 4294901760
        %724 = vmatpush1.msra.mxu0 %v723
        %725 = vmatprep.subr.mxu0 0.0
        %v726 = vand.u32 %v237, 4294901760
        %v727 = vsub.f32 %v237, %v726
        %v728 = vand.u32 %v727, 4294901760
        %729 = vmatpush1.msra.mxu0 %v728
        %730 = vmatprep.subr.mxu0 0.0
        %v731 = vand.u32 %v236, 4294901760
        %v732 = vsub.f32 %v236, %v731
        %v733 = vand.u32 %v732, 4294901760
        %734 = vmatpush1.msra.mxu0 %v733
        %735 = vmatprep.subr.mxu0 0.0
        %v736 = vand.u32 %v235, 4294901760
        %v737 = vsub.f32 %v235, %v736
        %v738 = vand.u32 %v737, 4294901760
        %739 = vmatpush1.msra.mxu0 %v738
        %740 = vmatprep.subr.mxu0 0.0
        %v741 = vand.u32 %v234, 4294901760
        %v742 = vsub.f32 %v234, %v741
        %v743 = vand.u32 %v742, 4294901760
        %744 = vmatpush1.msra.mxu0 %v743
        %745 = vmatprep.subr.mxu0 0.0
        %v746 = vand.u32 %v233, 4294901760
        %v747 = vsub.f32 %v233, %v746
        %v748 = vand.u32 %v747, 4294901760
        %749 = vmatpush1.msra.mxu0 %v748
        %750 = vmatprep.subr.mxu0 0.0
        %v751 = vand.u32 %v232, 4294901760
        %v752 = vsub.f32 %v232, %v751
        %v753 = vand.u32 %v752, 4294901760
        %754 = vmatpush1.msra.mxu0 %v753
        %755 = vmatprep.subr.mxu0 0.0
        %v756 = vand.u32 %v231, 4294901760
        %v757 = vsub.f32 %v231, %v756
        %v758 = vand.u32 %v757, 4294901760
        %759 = vmatpush1.msra.mxu0 %v758
        %760 = vmatprep.subr.mxu0 0.0
        %v761 = vand.u32 %v230, 4294901760
        %v762 = vsub.f32 %v230, %v761
        %v763 = vand.u32 %v762, 4294901760
        %764 = vmatpush1.msra.mxu0 %v763
        %765 = vmatprep.subr.mxu0 0.0
        %v766 = vand.u32 %v229, 4294901760
        %v767 = vsub.f32 %v229, %v766
        %v768 = vand.u32 %v767, 4294901760
        %769 = vmatpush1.msra.mxu0 %v768
        %770 = vmatprep.subr.mxu0 0.0
        %771 = vmatpush2.msra.mxu0 0.0
        %772 = vmatprep.subr.mxu0 0.0
        %773 = vmatpush2.msra.mxu0 0.0
        %774 = vmatprep.subr.mxu0 0.0
        %775 = vmatpush2.msra.mxu0 0.0
        %776 = vmatprep.subr.mxu0 0.0
        %777 = vmatpush2.msra.mxu0 0.0
        %778 = vmatprep.subr.mxu0 0.0
        %779 = vmatpush2.msra.mxu0 0.0
        %780 = vmatprep.subr.mxu0 0.0
        %781 = vmatpush2.msra.mxu0 0.0
        %782 = vmatprep.subr.mxu0 0.0
        %783 = vmatpush2.msra.mxu0 0.0
        %784 = vmatprep.subr.mxu0 0.0
        %785 = vmatpush2.msra.mxu0 0.0
        %786 = vmatprep.subr.mxu0 0.0
        %787 = vmatpush2.msra.mxu0 0.0
        %788 = vmatprep.subr.mxu0 0.0
        %789 = vmatpush2.msra.mxu0 0.0
        %790 = vmatprep.subr.mxu0 0.0
        %791 = vmatpush2.msra.mxu0 0.0
        %792 = vmatprep.subr.mxu0 0.0
        %793 = vmatpush2.msra.mxu0 0.0
        %794 = vmatprep.subr.mxu0 0.0
        %795 = vmatpush2.msra.mxu0 0.0
        %796 = vmatprep.subr.mxu0 0.0
        %797 = vmatpush2.msra.mxu0 0.0
        %798 = vmatprep.subr.mxu0 0.0
        %799 = vmatpush2.msra.mxu0 0.0
        %800 = vmatprep.subr.mxu0 0.0
        %801 = vmatpush2.msra.mxu0 0.0
        %802 = vmatprep.mubr.f32.mxu0 0.0
        %v803 = vand.u32 %v254, 4294901760
        %804 = vmatmul.mubr.f32.gmra.mxu0 %v803
        %v805 = vpop.f32.mrf.mxu0
        %v806 = vadd.f32 %v687, %v805
        %v807 = vpop.f32.mrf.mxu0
        %808 = vdwg.mxu0
        %809 = vmatprep.subr.mxu0 0.0
        %v810 = vand.u32 %v244, 4294901760
        %811 = vmatpush1.msra.mxu0 %v810
        %812 = vmatprep.subr.mxu0 0.0
        %v813 = vand.u32 %v243, 4294901760
        %814 = vmatpush1.msra.mxu0 %v813
        %815 = vmatprep.subr.mxu0 0.0
        %v816 = vand.u32 %v242, 4294901760
        %817 = vmatpush1.msra.mxu0 %v816
        %818 = vmatprep.subr.mxu0 0.0
        %v819 = vand.u32 %v241, 4294901760
        %820 = vmatpush1.msra.mxu0 %v819
        %821 = vmatprep.subr.mxu0 0.0
        %v822 = vand.u32 %v240, 4294901760
        %823 = vmatpush1.msra.mxu0 %v822
        %824 = vmatprep.subr.mxu0 0.0
        %v825 = vand.u32 %v239, 4294901760
        %826 = vmatpush1.msra.mxu0 %v825
        %827 = vmatprep.subr.mxu0 0.0
        %v828 = vand.u32 %v238, 4294901760
        %829 = vmatpush1.msra.mxu0 %v828
        %830 = vmatprep.subr.mxu0 0.0
        %v831 = vand.u32 %v237, 4294901760
        %832 = vmatpush1.msra.mxu0 %v831
        %833 = vmatprep.subr.mxu0 0.0
        %v834 = vand.u32 %v236, 4294901760
        %835 = vmatpush1.msra.mxu0 %v834
        %836 = vmatprep.subr.mxu0 0.0
        %v837 = vand.u32 %v235, 4294901760
        %838 = vmatpush1.msra.mxu0 %v837
        %839 = vmatprep.subr.mxu0 0.0
        %v840 = vand.u32 %v234, 4294901760
        %841 = vmatpush1.msra.mxu0 %v840
        %842 = vmatprep.subr.mxu0 0.0
        %v843 = vand.u32 %v233, 4294901760
        %844 = vmatpush1.msra.mxu0 %v843
        %845 = vmatprep.subr.mxu0 0.0
        %v846 = vand.u32 %v232, 4294901760
        %847 = vmatpush1.msra.mxu0 %v846
        %848 = vmatprep.subr.mxu0 0.0
        %v849 = vand.u32 %v231, 4294901760
        %850 = vmatpush1.msra.mxu0 %v849
        %851 = vmatprep.subr.mxu0 0.0
        %v852 = vand.u32 %v230, 4294901760
        %853 = vmatpush1.msra.mxu0 %v852
        %854 = vmatprep.subr.mxu0 0.0
        %v855 = vand.u32 %v229, 4294901760
        %856 = vmatpush1.msra.mxu0 %v855
        %857 = vmatprep.subr.mxu0 0.0
        %858 = vmatpush2.msra.mxu0 0.0
        %859 = vmatprep.subr.mxu0 0.0
        %860 = vmatpush2.msra.mxu0 0.0
        %861 = vmatprep.subr.mxu0 0.0
        %862 = vmatpush2.msra.mxu0 0.0
        %863 = vmatprep.subr.mxu0 0.0
        %864 = vmatpush2.msra.mxu0 0.0
        %865 = vmatprep.subr.mxu0 0.0
        %866 = vmatpush2.msra.mxu0 0.0
        %867 = vmatprep.subr.mxu0 0.0
        %868 = vmatpush2.msra.mxu0 0.0
        %869 = vmatprep.subr.mxu0 0.0
        %870 = vmatpush2.msra.mxu0 0.0
        %871 = vmatprep.subr.mxu0 0.0
        %872 = vmatpush2.msra.mxu0 0.0
        %873 = vmatprep.subr.mxu0 0.0
        %874 = vmatpush2.msra.mxu0 0.0
        %875 = vmatprep.subr.mxu0 0.0
        %876 = vmatpush2.msra.mxu0 0.0
        %877 = vmatprep.subr.mxu0 0.0
        %878 = vmatpush2.msra.mxu0 0.0
        %879 = vmatprep.subr.mxu0 0.0
        %880 = vmatpush2.msra.mxu0 0.0
        %881 = vmatprep.subr.mxu0 0.0
        %882 = vmatpush2.msra.mxu0 0.0
        %883 = vmatprep.subr.mxu0 0.0
        %884 = vmatpush2.msra.mxu0 0.0
        %885 = vmatprep.subr.mxu0 0.0
        %886 = vmatpush2.msra.mxu0 0.0
        %887 = vmatprep.subr.mxu0 0.0
        %888 = vmatpush2.msra.mxu0 0.0
        %889 = vmatprep.mubr.f32.mxu0 0.0
        %v890 = vand.u32 %v254, 4294901760
        %891 = vmatmul.mubr.f32.gmra.mxu0 %v890
        %v892 = vpop.f32.mrf.mxu0
        %v893 = vadd.f32 %v806, %v892
        %v894 = vpop.f32.mrf.mxu0
        %895 = vdwg.mxu0
        %896 = vst [vmem:[%s195] sm:$0xff] %v893
        %s897 = sand.u32 %s82, 1
        %s898 = scalar_lea.sflag [#allocation4], %s897
        %s899 = sand.u32 %s82, 1
        %s900 = smul.addr %s899, 8
        %s901 = scalar_lea.vmem [#allocation7], %s900
        // Predicated region
        $region37: #{tpu_custom_call.1} parent=27 // pred_check
          %p902 = pneg %p92
        $region38: #{tpu_custom_call.1} parent=27 // pred_check_branch
          %904 = sbr.rel (%p902) target = $region40
        $region39: #{tpu_custom_call.1} parent=27 // pred_region
          %s906 = ssub.s32 128, 128
          %907 = vsyncadd %s898, %s906
          %s908 = smul.addr %s22, 128
          %s909 = scalar_lea.hbm %s2, %s908
          %s911 = sshll.u32 %s901, 4
          %s912 = int_to_ptr.vmem [resolvable:$true] %s911
          %914 = dma.vmem_to_hbm [thread:$0]  %s912, 128, %s909, %s898
        $region40: #{tpu_custom_call.1} parent=27 // pred_fallthru
          _
      $region28: #{tpu_custom_call.1} parent=5 // pred_fallthru
        _
      %p915 = scmp.le.s32.totalorder 2, %s17
      // Predicated region
      $region41: #{tpu_custom_call.1} parent=5 // pred_check
        %p916 = pneg %p915
      $region42: #{tpu_custom_call.1} parent=5 // pred_check_branch
        %918 = sbr.rel (%p916) target = $region44
      $region43: #{tpu_custom_call.1} parent=5 // pred_region
        %s919 = ssub.s32 %s17, 2
        // Predicated region
        $region45: #{tpu_custom_call.1} parent=43 // pred_check
          %p920 = pneg %p98
        $region46: #{tpu_custom_call.1} parent=43 // pred_check_branch
          %922 = sbr.rel (%p920) target = $region48
        $region47: #{tpu_custom_call.1} parent=43 // pred_region
          %s923 = sand.u32 %s83, 1
          %s924 = scalar_lea.sflag [#allocation4], %s923
          %s925 = sand.u32 %s83, 1
          %s926 = smul.addr %s925, 8
          %s927 = scalar_lea.vmem [#allocation7], %s926
          %928 = dma.done %s924, 128
        $region48: #{tpu_custom_call.1} parent=43 // pred_fallthru
          _
      $region44: #{tpu_custom_call.1} parent=5 // pred_fallthru
        _
    $region6: #{tpu_custom_call.1} parent=1 // loop_footer
      %s21 = sadd.s32 1, %s17
    $region7: #{tpu_custom_call.1} parent=1 // loop_footer_branch
      %16 = sbr.rel target = $region3
    $region8: #{tpu_custom_call.1} parent=1 // loop_exit
      _
    %929 = vsyncpa [#allocation3], 1
    %s930 = scalar_lea.sflag [#allocation3], 1
    %931 = vsyncpa %s930, 1
    %932 = vsyncpa [#allocation6], 1
    %s933 = scalar_lea.sflag [#allocation6], 1
    %934 = vsyncpa %s933, 1
    %935 = vsyncpa [#allocation4], 1
    %s936 = scalar_lea.sflag [#allocation4], 1
    %937 = vsyncpa %s936, 1

</llo_original>
